<compile_context>
chip_gen: v7x
topology: tpu7x:2x2x1
jax: 0.10.0
libtpu: 0.0.40
codegen_flags: <defaults>
</compile_context>

<pallas_src>
import jax
import jax.numpy as jnp
from jax import lax
from jax.experimental import pallas as pl
from jax.experimental.pallas import tpu as pltpu


def _cdiv(a: int, b: int) -> int:
    return (a + b - 1) // b


def _round_up(x: int, m: int) -> int:
    return _cdiv(x, m) * m


def _default_num_atom_tiles() -> int:
    # v7x has 2 TensorCores per chip -> give the "parallel" atom axis 2 tiles there;
    # on v5e/v6e (1 TC) a second atom tile would only duplicate the MLP work.
    try:
        kind = jax.devices()[0].device_kind.lower()
    except Exception:
        return 1
    return 2 if ("v7" in kind or "7x" in kind) else 1


def _silu(x):
    # x * sigmoid(x); exp + approx reciprocal both use the EUP slot (VALU stays free).
    return x * pl.reciprocal(1.0 + jnp.exp(-x), approx=True)


def make_force_head_kernel(num_layers: int, reduction: str,
                           n_edges: int, te: int, ta: int):
    needs_edge_mask = (n_edges % te) != 0

    def kernel(*refs):
        idx_ref, forces_ref, vst_ref = refs[:3]
        wb_refs = refs[3:3 + 2 * num_layers]
        out_ref = refs[3 + 2 * num_layers]
        acc_ref = refs[3 + 2 * num_layers + 1] if reduction == "mean" else None

        a = pl.program_id(0)          # atom-tile index ("parallel")
        e = pl.program_id(1)          # edge-tile index ("arbitrary" reduction axis)
        n_e = pl.num_programs(1)

        # ---------------- MLP over this edge tile ----------------
        h = forces_ref[...]
        for l in range(num_layers - 1):               # D -> D layers on the MXU (bf16)
            w = wb_refs[2 * l][...]                   # bf16, pre-cast on host
            b = wb_refs[2 * l + 1][...]               # f32 (1, Dout)
            h = jnp.dot(h.astype(jnp.bfloat16), w,
                        preferred_element_type=jnp.float32) + b
            h = _silu(h)

        # Final D -> 1 layer: VPU multiply + lane reduction (weight passed as (1, D)).
        w_last = wb_refs[2 * num_layers - 2][...]      # (1, D) f32
        b_last = wb_refs[2 * num_layers - 1][...]      # (1, 1) f32
        s = jnp.sum(h.astype(jnp.float32) * w_last,
                    axis=-1, keepdims=True) + b_last   # (TE, 1)

        if needs_edge_mask:
            # Forces are not padded in HBM -> the last edge tile is ragged; zero its rows
            # so garbage / NaN never reaches the scatter matmul.
            row = lax.broadcasted_iota(jnp.int32, (te, 1), 0)
            s = jnp.where(e * te + row < n_edges, s, 0.0)

        # payload: columns 0..2 = s * V_st, column 3 (mean only) = per-edge count of 1.
        # (V_st payload rows past the real edge count are zero-padded on the host.)
        vst = vst_ref[...]                             # (TE, C) f32
        if reduction == "mean":
            col = lax.broadcasted_iota(jnp.int32, (te, 4), 1)
            payload = jnp.where(col < 3, s, 1.0) * vst  # (TE, 4)
        else:
            payload = s * vst                           # (TE, 3)

        # ---------------- scatter-sum as a one-hot matmul ----------------
        lane = lax.broadcasted_iota(jnp.int32, (te, ta), 1)
        local_idx = idx_ref[...] - a * ta               # offset on the small (TE,1) vector
        one_hot = (local_idx == lane).astype(jnp.float32)   # (TE, TA)

        # (C, TA) += payload^T @ one_hot ; edge dim contracted on BOTH operands so the
        # big (TE, TA) one-hot is never transposed.  f32 keeps per-edge precision.
        scattered = lax.dot_general(
            payload, one_hot,
            dimension_numbers=(((0,), (0,)), ((), ())),
            preferred_element_type=jnp.float32)

        if reduction == "mean":
            @pl.when(e == 0)
            def _init():
                acc_ref[...] = jnp.zeros_like(acc_ref)

            acc_ref[...] += scattered

            @pl.when(e == n_e - 1)
            def _finalize():
                acc = acc_ref[...]
                out_ref[...] = acc[0:3, :] / jnp.maximum(acc[3:4, :], 1.0)
        else:
            @pl.when(e == 0)
            def _init():
                out_ref[...] = jnp.zeros_like(out_ref)

            out_ref[...] += scattered                   # out block resident along e

    return kernel


def force_output_head(forces, v_st, idx_t, weights, biases, n_atoms,
                      reduction="sum", te=512, num_atom_tiles=None):
    """forces: (E, D), v_st: (E, 3), idx_t: (E,) int, weights[l]: (Din, Dout), biases[l]: (Dout,)."""
    E, D = forces.shape
    L = len(weights)
    assert L >= 1

    # --- edge tiling (reduction axis); forces stay unpadded, last tile may be ragged ---
    TE = min(te, E)
    if TE < E:
        TE = max(16, (TE // 16) * 16)        # bf16-friendly sublane granularity
    n_e = _cdiv(E, TE)
    E_pad = n_e * TE

    # --- atom tiling: one lane-dense tile (two on v7x for the second TensorCore) ---
    n_atoms_eff = max(int(n_atoms), 1)
    if num_atom_tiles is None:
        num_atom_tiles = _default_num_atom_tiles()
    TA = _round_up(_cdiv(n_atoms_eff, max(num_atom_tiles, 1)), 128)
    n_a = _cdiv(n_atoms_eff, TA)
    A_pad = n_a * TA

    C = 4 if reduction == "mean" else 3

    # idx: padded rows get A_pad (never matches any atom column of any tile).
    idx_p = jnp.pad(idx_t.astype(jnp.int32), (0, E_pad - E),
                    constant_values=A_pad).reshape(E_pad, 1)

    # V_st payload: cols 0..2 = V_st, col 3 (mean) = 1 per real edge; padded rows all-zero.
    vst = v_st.astype(jnp.float32)
    if reduction == "mean":
        vst = jnp.concatenate([vst, jnp.ones((E, 1), jnp.float32)], axis=1)
    vst_p = jnp.pad(vst, ((0, E_pad - E), (0, 0)))

    # Forces stay in HBM unpadded; pre-cast to bf16 once iff there is an MXU (D->D) layer.
    if L > 1 and forces.dtype != jnp.bfloat16:
        forces_in = forces.astype(jnp.bfloat16)
    else:
        forces_in = forces

    # Weights: D->D layers pre-cast to bf16 (MXU dtype); last layer kept f32 as a (1, D)
    # row for the VPU reduction.  Constant index_maps -> DMA'd once, resident in VMEM.
    wb_arrays, wb_specs = [], []
    for l in range(L):
        if l < L - 1:
            w = weights[l].astype(jnp.bfloat16)
        else:
            w = weights[l].astype(jnp.float32).reshape(1, -1)
        b = biases[l].astype(jnp.float32).reshape(1, -1)
        wb_arrays += [w, b]
        wb_specs += [pl.BlockSpec(w.shape, lambda a_i, e_i: (0, 0)),
                     pl.BlockSpec(b.shape, lambda a_i, e_i: (0, 0))]

    kernel = make_force_head_kernel(L, reduction, E, TE, TA)

    # Advisory cost estimate (forces / MLP are re-read once per atom tile).
    wdims = [tuple(w.shape) for w in weights]
    mlp_flops = n_a * sum(2 * E * din * dout for (din, dout) in wdims)
    flops = int(mlp_flops + 2 * E_pad * A_pad * C + 4 * E_pad * C)
    transcendentals = int(n_a * E * sum(dout for (_, dout) in wdims[:-1]))
    bytes_accessed = int(n_a * forces_in.size * forces_in.dtype.itemsize
                         + n_a * (idx_p.size * 4 + vst_p.size * 4)
                         + sum(x.size * x.dtype.itemsize for x in wb_arrays)
                         + 3 * A_pad * 4)

    scratch_shapes = []
    if reduction == "mean":
        scratch_shapes.append(pltpu.VMEM((4, TA), jnp.float32))

    out = pl.pallas_call(
        kernel,
        out_shape=jax.ShapeDtypeStruct((3, A_pad), jnp.float32),
        grid_spec=pltpu.PrefetchScalarGridSpec(
            num_scalar_prefetch=0,
            grid=(n_a, n_e),
            in_specs=[pl.BlockSpec((TE, 1), lambda a_i, e_i: (e_i, 0)),   # idx
                      pl.BlockSpec((TE, D), lambda a_i, e_i: (e_i, 0)),   # forces (ragged ok)
                      pl.BlockSpec((TE, C), lambda a_i, e_i: (e_i, 0))]   # V_st payload
                     + wb_specs,
            out_specs=pl.BlockSpec((3, TA), lambda a_i, e_i: (0, a_i)),
            scratch_shapes=scratch_shapes),
        compiler_params=pltpu.CompilerParams(
            dimension_semantics=("parallel", "arbitrary")),
        cost_estimate=pl.CostEstimate(flops=flops,
                                      transcendentals=transcendentals,
                                      bytes_accessed=bytes_accessed),
    )(idx_p, forces_in, vst_p, *wb_arrays)

    # lane-dense (3, A_pad) -> module layout (n_atoms, 3)
    return out[:, :n_atoms].T


def force_output_head_reference(forces, v_st, idx_t, weights, biases, n_atoms, reduction="sum"):
    h = forces.astype(jnp.float32)
    for l, (w, b) in enumerate(zip(weights, biases)):
        h = h @ w.astype(jnp.float32) + b.astype(jnp.float32)
        if l < len(weights) - 1:
            h = jax.nn.silu(h)
    edge_out = h * v_st.astype(jnp.float32)
    out = jnp.zeros((n_atoms, 3), jnp.float32).at[idx_t].add(edge_out)
    if reduction == "mean":
        cnt = jnp.zeros((n_atoms, 1), jnp.float32).at[idx_t].add(1.0)
        out = out / jnp.maximum(cnt, 1.0)
    return out


if __name__ == "__main__":
    n_atoms = 8
    n_edges = 16
    d_model_edge = 32

    key = jax.random.PRNGKey(0)
    k_forces, k_vst, k_idx, k_w = jax.random.split(key, 4)

    forces = jax.random.normal(k_forces, (n_edges, d_model_edge), dtype=jnp.float32)
    v_st = jax.random.normal(k_vst, (n_edges, 3), dtype=jnp.float32)
    idx_t = jax.random.randint(k_idx, (n_edges,), 0, n_atoms, dtype=jnp.int32)

    def make_mlp(key, dims):
        ws, bs = [], []
        for li in range(len(dims) - 1):
            key, kw_i, kb_i = jax.random.split(key, 3)
            scale = 1.0 / float(dims[li]) ** 0.5
            ws.append(jax.random.uniform(kw_i, (dims[li], dims[li + 1]),
                                         minval=-scale, maxval=scale, dtype=jnp.float32))
            bs.append(jax.random.uniform(kb_i, (dims[li + 1],),
                                         minval=-scale, maxval=scale, dtype=jnp.float32))
        return ws, bs, key

    # Config 1: module defaults (num_mlps=1, reduction='sum') -- pure f32 VPU MLP path.
    w1, b1, k_w = make_mlp(k_w, [d_model_edge] * 1 + [1])
    out1 = jax.block_until_ready(
        force_output_head(forces, v_st, idx_t, w1, b1, n_atoms, reduction="sum"))
    ref1 = force_output_head_reference(forces, v_st, idx_t, w1, b1, n_atoms, "sum")
    assert out1.shape == (n_atoms, 3)
    assert jnp.allclose(out1, ref1, atol=5e-2, rtol=5e-2), (out1, ref1)

    # Config 2: num_mlps=2 (bf16 MXU layer) + 'mean' (count folded into the scatter matmul).
    w2, b2, k_w = make_mlp(k_w, [d_model_edge] * 2 + [1])
    out2 = jax.block_until_ready(
        force_output_head(forces, v_st, idx_t, w2, b2, n_atoms, reduction="mean"))
    ref2 = force_output_head_reference(forces, v_st, idx_t, w2, b2, n_atoms, "mean")
    assert jnp.allclose(out2, ref2, atol=5e-2, rtol=5e-2), (out2, ref2)

    # Config 3: ragged multi-tile edge axis (E not a multiple of TE, forces unpadded in HBM).
    n_edges3 = 40
    k_f3, k_v3, k_i3, k_w = jax.random.split(k_w, 4)
    forces3 = jax.random.normal(k_f3, (n_edges3, d_model_edge), dtype=jnp.float32)
    v_st3 = jax.random.normal(k_v3, (n_edges3, 3), dtype=jnp.float32)
    idx_t3 = jax.random.randint(k_i3, (n_edges3,), 0, n_atoms, dtype=jnp.int32)
    out3 = jax.block_until_ready(
        force_output_head(forces3, v_st3, idx_t3, w2, b2, n_atoms, reduction="sum", te=16))
    ref3 = force_output_head_reference(forces3, v_st3, idx_t3, w2, b2, n_atoms, "sum")
    assert jnp.allclose(out3, ref3, atol=5e-2, rtol=5e-2), (out3, ref3)

    print("KERNEL_OK")
</pallas_src>

<mosaic_0001>
module attributes {stable_mosaic.version = 11 : i64} {
  func.func @kernel(%arg0: i32, %arg1: i32, %arg2: memref<16x1xi32, #tpu.memory_space<vmem>>, %arg3: memref<16x32xf32, #tpu.memory_space<vmem>>, %arg4: memref<16x3xf32, #tpu.memory_space<vmem>>, %arg5: memref<1x32xf32, #tpu.memory_space<vmem>>, %arg6: memref<1x1xf32, #tpu.memory_space<vmem>>, %arg7: memref<3x128xf32, #tpu.memory_space<vmem>>) attributes {dimension_semantics = [#tpu.dimension_semantics<parallel>, #tpu.dimension_semantics<arbitrary>], iteration_bounds = array<i64: 1, 1>, scalar_prefetch = 0 : i64, scratch_operands = 0 : i64, tpu.core_type = #tpu.core_type<tc>, window_params = [{transform_indices = @transform_0, window_bounds = array<i64: 16, 1>}, {transform_indices = @transform_1, window_bounds = array<i64: 16, 32>}, {transform_indices = @transform_2, window_bounds = array<i64: 16, 3>}, {pipeline_mode = #tpu.pipeline_mode<synchronous>, transform_indices = @transform_3, window_bounds = array<i64: 1, 32>}, {pipeline_mode = #tpu.pipeline_mode<synchronous>, transform_indices = @transform_4, window_bounds = array<i64: 1, 1>}, {transform_indices = @transform_5, window_bounds = array<i64: 3, 128>}]} {
    %c0 = arith.constant 0 : index
    %c0_0 = arith.constant 0 : index
    %0 = vector.load %arg3[%c0, %c0_0] : memref<16x32xf32, #tpu.memory_space<vmem>>, vector<16x32xf32>
    %c0_1 = arith.constant 0 : index
    %c0_2 = arith.constant 0 : index
    %1 = vector.load %arg5[%c0_1, %c0_2] : memref<1x32xf32, #tpu.memory_space<vmem>>, vector<1x32xf32>
    %c0_3 = arith.constant 0 : index
    %c0_4 = arith.constant 0 : index
    %2 = vector.load %arg6[%c0_3, %c0_4] : memref<1x1xf32, #tpu.memory_space<vmem>>, vector<1x1xf32>
    %3 = vector.broadcast %1 : vector<1x32xf32> to vector<16x32xf32>
    %4 = arith.mulf %0, %3 : vector<16x32xf32>
    %cst = arith.constant dense<0.000000e+00> : vector<16xf32>
    %5 = vector.multi_reduction <add>, %4, %cst [1] : vector<16x32xf32> to vector<16xf32>
    %6 = vector.shape_cast %5 : vector<16xf32> to vector<16x1xf32>
    %7 = vector.broadcast %2 : vector<1x1xf32> to vector<16x1xf32>
    %8 = arith.addf %6, %7 : vector<16x1xf32>
    %c0_5 = arith.constant 0 : index
    %c0_6 = arith.constant 0 : index
    %9 = vector.load %arg4[%c0_5, %c0_6] : memref<16x3xf32, #tpu.memory_space<vmem>>, vector<16x3xf32>
    %10 = vector.broadcast %8 : vector<16x1xf32> to vector<16x3xf32>
    %11 = arith.mulf %10, %9 : vector<16x3xf32>
    %12 = tpu.iota {dimensions = array<i32: 1>} : vector<16x128xi32>
    %c0_7 = arith.constant 0 : index
    %c0_8 = arith.constant 0 : index
    %13 = vector.load %arg2[%c0_7, %c0_8] : memref<16x1xi32, #tpu.memory_space<vmem>>, vector<16x1xi32>
    %c128_i32 = arith.constant 128 : i32
    %14 = arith.muli %arg0, %c128_i32 : i32
    %15 = vector.broadcast %14 : i32 to vector<16x1xi32>
    %16 = arith.subi %13, %15 : vector<16x1xi32>
    %17 = vector.broadcast %16 : vector<16x1xi32> to vector<16x128xi32>
    %18 = arith.cmpi eq, %17, %12 : vector<16x128xi32>
    %19 = arith.extui %18 : vector<16x128xi1> to vector<16x128xi32>
    %20 = arith.sitofp %19 : vector<16x128xi32> to vector<16x128xf32>
    %cst_9 = arith.constant dense<0.000000e+00> : vector<3x128xf32>
    %21 = tpu.matmul %11, %20, %cst_9 {dimension_numbers = #tpu.dot_dimension_numbers<[0], [0], [1], [1], [0, 1, 1, 1], [], []>} : vector<16x3xf32>, vector<16x128xf32>, vector<3x128xf32> -> vector<3x128xf32>
    %c0_i32 = arith.constant 0 : i32
    %22 = arith.cmpi eq, %arg1, %c0_i32 : i32
    %23 = arith.extui %22 : i1 to i32
    %c0_i32_10 = arith.constant 0 : i32
    %24 = arith.cmpi ne, %23, %c0_i32_10 : i32
    scf.if %24 {
      %cst_15 = arith.constant 0.000000e+00 : f32
      %28 = vector.broadcast %cst_15 : f32 to vector<3x128xf32>
      %c0_16 = arith.constant 0 : index
      %c0_17 = arith.constant 0 : index
      %29 = vector.load %arg7[%c0_16, %c0_17] : memref<3x128xf32, #tpu.memory_space<vmem>>, vector<3x128xf32>
      tpu.vector_store %arg7[%c0_16, %c0_17], %28 {strides = array<i32>} : memref<3x128xf32, #tpu.memory_space<vmem>>, vector<3x128xf32>,
    } else {
    }
    %c0_11 = arith.constant 0 : index
    %c0_12 = arith.constant 0 : index
    %25 = vector.load %arg7[%c0_11, %c0_12] : memref<3x128xf32, #tpu.memory_space<vmem>>, vector<3x128xf32>
    %26 = arith.addf %25, %21 : vector<3x128xf32>
    %c0_13 = arith.constant 0 : index
    %c0_14 = arith.constant 0 : index
    %27 = vector.load %arg7[%c0_13, %c0_14] : memref<3x128xf32, #tpu.memory_space<vmem>>, vector<3x128xf32>
    tpu.vector_store %arg7[%c0_13, %c0_14], %26 {strides = array<i32>} : memref<3x128xf32, #tpu.memory_space<vmem>>, vector<3x128xf32>,
    return
  }
  func.func @transform_0(%arg0: i32, %arg1: i32) -> (i32, i32) {
    %c0_i32 = arith.constant 0 : i32
    %c0_i32_0 = arith.constant 0 : i32
    return %arg1, %c0_i32 : i32, i32
  }
  func.func @transform_1(%arg0: i32, %arg1: i32) -> (i32, i32) {
    %c0_i32 = arith.constant 0 : i32
    %c0_i32_0 = arith.constant 0 : i32
    return %arg1, %c0_i32 : i32, i32
  }
  func.func @transform_2(%arg0: i32, %arg1: i32) -> (i32, i32) {
    %c0_i32 = arith.constant 0 : i32
    %c0_i32_0 = arith.constant 0 : i32
    return %arg1, %c0_i32 : i32, i32
  }
  func.func @transform_3(%arg0: i32, %arg1: i32) -> (i32, i32) {
    %c0_i32 = arith.constant 0 : i32
    %c0_i32_0 = arith.constant 0 : i32
    %c0_i32_1 = arith.constant 0 : i32
    return %c0_i32, %c0_i32_0 : i32, i32
  }
  func.func @transform_4(%arg0: i32, %arg1: i32) -> (i32, i32) {
    %c0_i32 = arith.constant 0 : i32
    %c0_i32_0 = arith.constant 0 : i32
    %c0_i32_1 = arith.constant 0 : i32
    return %c0_i32, %c0_i32_0 : i32, i32
  }
  func.func @transform_5(%arg0: i32, %arg1: i32) -> (i32, i32) {
    %c0_i32 = arith.constant 0 : i32
    %c0_i32_0 = arith.constant 0 : i32
    return %c0_i32, %arg0 : i32, i32
  }
}

</mosaic_0001>

<llo_original>
// kernel: tpu_custom_call.1
$region0: #{tpu_custom_call.1}
  #allocation0 [shape = 'u32[]', space=smem, size = 0x4, offset = 0x4, fixed_abs, tag = 'smem constant byte address 0x4 - core index']
  #allocation1 [shape = 'u32[144,128]{1,0:T(1,128)}', space=vmem, size = 0x12000, scoped, tag = 'internal scratch']
  #allocation2 [shape = 'f32[1,1]{1,0:T(1,128)S(1)}', space=vmem, size = 0x200, scoped, tag = 'scoped memory for tpu_custom_call.1']
  %s0 = inlined_call_operand.vmem [shape: s32[16,1], index: 0, kind: input, shape index: {}]
  %s1 = inlined_call_operand.vmem [shape: f32[16,32], index: 1, kind: input, shape index: {}]
  %s2 = inlined_call_operand.vmem [shape: f32[16,3], index: 2, kind: input, shape index: {}]
  %s3 = inlined_call_operand.vmem [shape: f32[1,32], index: 3, kind: input, shape index: {}]
  %s4 = inlined_call_operand.<no memory space> [shape: f32[1,1], index: 4, kind: input, shape index: {}]
  %s5 = inlined_call_operand.hbm [shape: f32[3,128], index: 5, kind: output, shape index: {}]
  %s6 = sld [smem:[#allocation0]]
  $region34: #{tpu_custom_call.1} parent=0
    _
  %s8 = ssub.s32 1, %s6
  %s9 = scalar_select 0, %s8, %s6
  %v10 = vstv %s4
  %11 = vst [vmem:[#allocation2] sm:$0x1] %v10
  $region1: #{tpu_custom_call.1} parent=0
    #allocation3 [shape = 'u8[2048]{0}', space=vmem, size = 0x800, scoped, tag = 'output window, operand 0, single buffered']
    #allocation4 [shape = 's32[1]{0}', space=sflag, size = 0x4, scoped, tag = 'scoped memory for tpu_custom_call.1']
    %12 = vsyncpa [#allocation4], 0
    // Predicated region
    $region2: #{tpu_custom_call.1} parent=1 // pred_check
      _
    $region3: #{tpu_custom_call.1} parent=1 // pred_check_branch
      %14 = sbr.rel (0) target = $region5
    $region4: #{tpu_custom_call.1} parent=1 // pred_region
      _
    $region5: #{tpu_custom_call.1} parent=1 // pred_fallthru
      _
    // Predicated region
    $region6: #{tpu_custom_call.1} parent=1 // pred_check
      _
    $region7: #{tpu_custom_call.1} parent=1 // pred_check_branch
      %16 = sbr.rel (0) target = $region9
    $region8: #{tpu_custom_call.1} parent=1 // pred_region
      _
    $region9: #{tpu_custom_call.1} parent=1 // pred_fallthru
      _
    // Predicated region
    $region10: #{tpu_custom_call.1} parent=1 // pred_check
      _
    $region11: #{tpu_custom_call.1} parent=1 // pred_check_branch
      %18 = sbr.rel (0) target = $region13
    $region12: #{tpu_custom_call.1} parent=1 // pred_region
      _
    $region13: #{tpu_custom_call.1} parent=1 // pred_fallthru
      _
    // Predicated region
    $region14: #{tpu_custom_call.1} parent=1 // pred_check
      _
    $region15: #{tpu_custom_call.1} parent=1 // pred_check_branch
      %20 = sbr.rel (0) target = $region17
    $region16: #{tpu_custom_call.1} parent=1 // pred_region
      _
    $region17: #{tpu_custom_call.1} parent=1 // pred_fallthru
      _
    // Predicated region
    $region18: #{tpu_custom_call.1} parent=1 // pred_check
      _
    $region19: #{tpu_custom_call.1} parent=1 // pred_check_branch
      %22 = sbr.rel (0) target = $region21
    $region20: #{tpu_custom_call.1} parent=1 // pred_region
      _
    $region21: #{tpu_custom_call.1} parent=1 // pred_fallthru
      _
    %v23 = vld [vmem:[%s1] sm:$0xff]
    %v24 = vld [vmem:[%s1 + $0x8] sm:$0xff]
    %v25 = vld [vmem:[%s3] sm:$0x1]
    %v26 = vld [vmem:[#allocation2] sm:$0x1]
    %v28 = vlaneseq
    %v29 = vshrl.u32 %v28, 7
    %v30 = vsub.s32 0, %v29
    %v31 = vrot.slane %v25, %v30
    %v33 = vmul.f32 %v23, %v31
    %v34 = vmul.f32 %v24, %v31
    %vm35 = vcmask 261120
    %v36 = vsel %vm35, %v33, 0.0
    %37 = vadd.xlane.f32.xlu0 %v36
    %v38 = vpop.xlane.xlu0 %37
    %v39 = vsel %vm35, %v34, 0.0
    %40 = vadd.xlane.f32.xlu0 %v39
    %v41 = vpop.xlane.xlu0 %40
    %v43 = vlaneseq
    %v44 = vshrl.u32 %v43, 7
    %v45 = vsub.s32 0, %v44
    %v46 = vrot.slane %v26, %v45
    %v48 = vadd.f32 %v38, %v46
    %v49 = vadd.f32 %v41, %v46
    %v50 = vld [vmem:[%s2] sm:$0xff]
    %v51 = vld [vmem:[%s2 + $0x8] sm:$0xff]
    %53 = vset.pattern.permute.xlu0 0
    %54 = vperm.xlu0 %53, %v48
    %v55 = vpop.permute.xlu0 %54
    %58 = vset.pattern.permute.xlu0 0
    %59 = vperm.xlu0 %58, %v49
    %v60 = vpop.permute.xlu0 %59
    %v62 = vmul.f32 %v55, %v50
    %v63 = vmul.f32 %v60, %v51
    %v64 = vlaneseq
    %v65 = vand.u32 %v64, 127
    %v66 = vld [vmem:[%s0] sm:$0xff]
    %v67 = vld [vmem:[%s0 + $0x8] sm:$0xff]
    %s68 = smul.u32 0, 128
    %v69 = vstv %s68
    %v70 = vsub.s32 %v66, %v69
    %v71 = vsub.s32 %v67, %v69
    %72 = vset.pattern.permute.xlu0 0
    %73 = vperm.xlu0 %72, %v70
    %v74 = vpop.permute.xlu0 %73
    %75 = vset.pattern.permute.xlu0 0
    %76 = vperm.xlu0 %75, %v71
    %v77 = vpop.permute.xlu0 %76
    %vm78 = vcmp.eq.s32.totalorder %v74, %v65
    %vm79 = vcmp.eq.s32.totalorder %v77, %v65
    %v80 = vsel %vm78, 1, 0
    %v81 = vsel %vm79, 1, 0
    %v82 = vcvt.s32.f32 %v80
    %v83 = vcvt.s32.f32 %v81
    %84 = vxpose.xlu0.b32.start [1/16] %v62, 128
    %85 = vxpose.xlu0.b32.cont [2/16] %v63, 128
    %86 = vxpose.xlu0.b32.cont [3/16] 0.0, 128
    %87 = vxpose.xlu0.b32.cont [4/16] 0.0, 128
    %88 = vxpose.xlu0.b32.cont [5/16] 0.0, 128
    %89 = vxpose.xlu0.b32.cont [6/16] 0.0, 128
    %90 = vxpose.xlu0.b32.cont [7/16] 0.0, 128
    %91 = vxpose.xlu0.b32.cont [8/16] 0.0, 128
    %92 = vxpose.xlu0.b32.cont [9/16] 0.0, 128
    %93 = vxpose.xlu0.b32.cont [10/16] 0.0, 128
    %94 = vxpose.xlu0.b32.cont [11/16] 0.0, 128
    %95 = vxpose.xlu0.b32.cont [12/16] 0.0, 128
    %96 = vxpose.xlu0.b32.cont [13/16] 0.0, 128
    %97 = vxpose.xlu0.b32.cont [14/16] 0.0, 128
    %98 = vxpose.xlu0.b32.cont [15/16] 0.0, 128
    %99 = vxpose.xlu0.b32.end [16/16] 0.0, 128
    %v100 = vpop.trf.xlu0
    %v101 = vpop.trf.xlu0
    %v102 = vpop.trf.xlu0
    %v103 = vpop.trf.xlu0
    %v104 = vpop.trf.xlu0
    %v105 = vpop.trf.xlu0
    %v106 = vpop.trf.xlu0
    %v107 = vpop.trf.xlu0
    %v108 = vpop.trf.xlu0
    %v109 = vpop.trf.xlu0
    %v110 = vpop.trf.xlu0
    %v111 = vpop.trf.xlu0
    %v112 = vpop.trf.xlu0
    %v113 = vpop.trf.xlu0
    %v114 = vpop.trf.xlu0
    %v115 = vpop.trf.xlu0
    %vm116 = vcmask 130048
    %v118 = vsel %vm116, %v100, 0
    %120 = vmatprep.subr.mxu0 0.0
    %121 = vmatpush1.msra.mxu0 %v82
    %122 = vmatprep.subr.mxu0 0.0
    %123 = vmatpush1.msra.mxu0 %v83
    %124 = vmatprep.subr.mxu0 0.0
    %125 = vmatpush1.msra.mxu0 0.0
    %126 = vmatprep.subr.mxu0 0.0
    %127 = vmatpush1.msra.mxu0 0.0
    %128 = vmatprep.subr.mxu0 0.0
    %129 = vmatpush1.msra.mxu0 0.0
    %130 = vmatprep.subr.mxu0 0.0
    %131 = vmatpush1.msra.mxu0 0.0
    %132 = vmatprep.subr.mxu0 0.0
    %133 = vmatpush1.msra.mxu0 0.0
    %134 = vmatprep.subr.mxu0 0.0
    %135 = vmatpush1.msra.mxu0 0.0
    %136 = vmatprep.subr.mxu0 0.0
    %137 = vmatpush1.msra.mxu0 0.0
    %138 = vmatprep.subr.mxu0 0.0
    %139 = vmatpush1.msra.mxu0 0.0
    %140 = vmatprep.subr.mxu0 0.0
    %141 = vmatpush1.msra.mxu0 0.0
    %142 = vmatprep.subr.mxu0 0.0
    %143 = vmatpush1.msra.mxu0 0.0
    %144 = vmatprep.subr.mxu0 0.0
    %145 = vmatpush1.msra.mxu0 0.0
    %146 = vmatprep.subr.mxu0 0.0
    %147 = vmatpush1.msra.mxu0 0.0
    %148 = vmatprep.subr.mxu0 0.0
    %149 = vmatpush1.msra.mxu0 0.0
    %150 = vmatprep.subr.mxu0 0.0
    %151 = vmatpush1.msra.mxu0 0.0
    %152 = vmatprep.subr.mxu0 0.0
    %153 = vmatpush1.msra.mxu0 0.0
    %154 = vmatprep.subr.mxu0 0.0
    %155 = vmatpush1.msra.mxu0 0.0
    %156 = vmatprep.subr.mxu0 0.0
    %157 = vmatpush1.msra.mxu0 0.0
    %158 = vmatprep.subr.mxu0 0.0
    %159 = vmatpush1.msra.mxu0 0.0
    %160 = vmatprep.subr.mxu0 0.0
    %161 = vmatpush1.msra.mxu0 0.0
    %162 = vmatprep.subr.mxu0 0.0
    %163 = vmatpush1.msra.mxu0 0.0
    %164 = vmatprep.subr.mxu0 0.0
    %165 = vmatpush1.msra.mxu0 0.0
    %166 = vmatprep.subr.mxu0 0.0
    %167 = vmatpush1.msra.mxu0 0.0
    %168 = vmatprep.subr.mxu0 0.0
    %169 = vmatpush1.msra.mxu0 0.0
    %170 = vmatprep.subr.mxu0 0.0
    %171 = vmatpush1.msra.mxu0 0.0
    %172 = vmatprep.subr.mxu0 0.0
    %173 = vmatpush1.msra.mxu0 0.0
    %174 = vmatprep.subr.mxu0 0.0
    %175 = vmatpush1.msra.mxu0 0.0
    %176 = vmatprep.subr.mxu0 0.0
    %177 = vmatpush1.msra.mxu0 0.0
    %178 = vmatprep.subr.mxu0 0.0
    %179 = vmatpush1.msra.mxu0 0.0
    %180 = vmatprep.subr.mxu0 0.0
    %181 = vmatpush1.msra.mxu0 0.0
    %182 = vmatprep.subr.mxu0 0.0
    %183 = vmatpush1.msra.mxu0 0.0
    %184 = vmatprep.mubr.f32.mxu0 0.0
    %185 = vmatmul.mubr.f32.gmra.mrb[0].mxu0 %v118
    %v186 = vpop.f32.mrb[0].mxu0
    %v187 = vadd.f32 0.0, %v186
    %v188 = vpop.f32.mrb[0].mxu0
    %189 = vdwg.mxu0
    %p190 = scmp.eq.s32.totalorder 0, 0
    // Predicated region
    $region22: #{tpu_custom_call.1} parent=1 // pred_check
      %p191 = pneg %p190
    $region23: #{tpu_custom_call.1} parent=1 // pred_check_branch
      %193 = sbr.rel (%p191) target = $region25
    $region24: #{tpu_custom_call.1} parent=1 // pred_region
      %194 = vst [vmem:[#allocation3] sm:$0x7] 0.0
    $region25: #{tpu_custom_call.1} parent=1 // pred_fallthru
      _
    %v195 = vld [vmem:[#allocation3] sm:$0x7]
    %v196 = vadd.f32 %v195, %v187
    %197 = vst [vmem:[#allocation3] sm:$0x7] %v196
    // Predicated region
    $region26: #{tpu_custom_call.1} parent=1 // pred_check
      _
    $region27: #{tpu_custom_call.1} parent=1 // pred_check_branch
      %199 = sbr.rel (0) target = $region29
    $region28: #{tpu_custom_call.1} parent=1 // pred_region
      %s201 = ssub.s32 64, 64
      %202 = vsyncadd [#allocation4], %s201
      %s204 = sshll.u32 [#allocation3], 4
      %s205 = int_to_ptr.vmem [resolvable:$true] %s204
      %207 = dma.vmem_to_hbm [thread:$0]  %s205, 64, %s5, [#allocation4]
    $region29: #{tpu_custom_call.1} parent=1 // pred_fallthru
      _
    // Predicated region
    $region30: #{tpu_custom_call.1} parent=1 // pred_check
      _
    $region31: #{tpu_custom_call.1} parent=1 // pred_check_branch
      %209 = sbr.rel (0) target = $region33
    $region32: #{tpu_custom_call.1} parent=1 // pred_region
      %210 = dma.done [#allocation4], 64
    $region33: #{tpu_custom_call.1} parent=1 // pred_fallthru
      _
    %211 = vsyncpa [#allocation4], 1

</llo_original>
